<compile_context>
chip_gen: v6e
topology: v6e:2x2x1
jax: 0.10.0
libtpu: 0.0.40
codegen_flags: <defaults>
</compile_context>

<pallas_src>
import functools

import jax
import jax.numpy as jnp
from jax.experimental import pallas as pl
from jax.experimental.pallas import tpu as pltpu


# ------------------------------ helpers ------------------------------------ #
def _round_up(n, m):
    return ((n + m - 1) // m) * m


def _pad2d(a, rows, cols):
    r, c = a.shape
    if r == rows and c == cols:
        return a
    return jnp.pad(a, ((0, rows - r), (0, cols - c)))


def _full_spec(shape):
    zeros = (0,) * len(shape)
    return pl.BlockSpec(shape, lambda i, _z=zeros: _z)


# --------------------------- fused Pallas kernel --------------------------- #
def _dgcn_fused_kernel(ufea_ref, vfea_ref, uv_ref, vu_ref,
                       w1_ref, w2_ref, w3_ref, w4_ref,
                       b1_ref, b2_ref, b3_ref, b4_ref,
                       user_out_ref, item_out_ref, *, alpha):
    uv = uv_ref[...]            # (Up, Vp)  UV_adj
    vu = vu_ref[...]            # (Vp, Up)  VU_adj

    # gc1: h_u = LeakyReLU(VU @ (ufea @ W1) + b1)          -> (Vp, Dp)
    s = jnp.dot(ufea_ref[...], w1_ref[...], preferred_element_type=jnp.float32)
    z = jnp.dot(vu, s, preferred_element_type=jnp.float32) + b1_ref[...]
    h_u = jnp.where(z > 0, z, alpha * z)

    # gc2: h_v = LeakyReLU(UV @ (vfea @ W2) + b2)          -> (Up, Dp)
    s = jnp.dot(vfea_ref[...], w2_ref[...], preferred_element_type=jnp.float32)
    z = jnp.dot(uv, s, preferred_element_type=jnp.float32) + b2_ref[...]
    h_v = jnp.where(z > 0, z, alpha * z)

    # gc3: user_ho = relu(leaky(UV @ (h_u @ W3) + b3)) == relu(...)  -> (Up, Dp)
    s = jnp.dot(h_u, w3_ref[...], preferred_element_type=jnp.float32)
    z = jnp.dot(uv, s, preferred_element_type=jnp.float32) + b3_ref[...]
    user_out_ref[...] = jnp.maximum(z, 0.0).astype(user_out_ref.dtype)

    # gc4: item_ho = relu(VU @ (h_v @ W4) + b4)            -> (Vp, Dp)
    s = jnp.dot(h_v, w4_ref[...], preferred_element_type=jnp.float32)
    z = jnp.dot(vu, s, preferred_element_type=jnp.float32) + b4_ref[...]
    item_out_ref[...] = jnp.maximum(z, 0.0).astype(item_out_ref.dtype)


# ----------------------------- DGCNLayer forward --------------------------- #
def dgcn_layer_forward(ufea, vfea, UV_adj, VU_adj, params, *, alpha):
    """Fused forward of DGCNLayer. Dropout is identity (eval mode)."""
    U, D = ufea.shape
    V, Dv = vfea.shape
    assert Dv == D
    assert UV_adj.shape == (U, V) and VU_adj.shape == (V, U)

    # Pad: feature dim -> multiple of 128 (lane-dense), node dims -> mult of 8.
    Dp = _round_up(D, 128)
    Up = _round_up(U, 8)
    Vp = _round_up(V, 8)

    ufea_p = _pad2d(ufea, Up, Dp)
    vfea_p = _pad2d(vfea, Vp, Dp)
    uv_p = _pad2d(UV_adj, Up, Vp)          # zero-padded columns kill padded
    vu_p = _pad2d(VU_adj, Vp, Up)          # source-node contributions
    w_p = [_pad2d(params[f"w{i}"], Dp, Dp) for i in (1, 2, 3, 4)]
    b_p = [_pad2d(params[f"b{i}"].reshape(1, D), 1, Dp) for i in (1, 2, 3, 4)]

    kernel = functools.partial(_dgcn_fused_kernel, alpha=alpha)
    inputs = [ufea_p, vfea_p, uv_p, vu_p, *w_p, *b_p]

    user_p, item_p = pl.pallas_call(
        kernel,
        out_shape=(jax.ShapeDtypeStruct((Up, Dp), ufea.dtype),
                   jax.ShapeDtypeStruct((Vp, Dp), vfea.dtype)),
        grid_spec=pltpu.PrefetchScalarGridSpec(
            num_scalar_prefetch=0,
            grid=(1,),                               # fully fused: one step
            in_specs=[_full_spec(a.shape) for a in inputs],
            out_specs=[_full_spec((Up, Dp)), _full_spec((Vp, Dp))],
        ),
        compiler_params=pltpu.CompilerParams(
            dimension_semantics=("arbitrary",),
            vmem_limit_bytes=64 << 20,
        ),
    )(*inputs)

    # Strip padding.
    return user_p[:U, :D], item_p[:V, :D]


# ----------------------------- reference (pure JAX) ------------------------ #
def _ref_gcn(x, adj, w, b, alpha):
    z = adj @ (x @ w) + b
    return jnp.where(z > 0, z, alpha * z)


def _ref_forward(ufea, vfea, UV_adj, VU_adj, p, alpha):
    h_u = _ref_gcn(ufea, VU_adj, p["w1"], p["b1"], alpha)
    h_v = _ref_gcn(vfea, UV_adj, p["w2"], p["b2"], alpha)
    u = jnp.maximum(_ref_gcn(h_u, UV_adj, p["w3"], p["b3"], alpha), 0.0)
    v = jnp.maximum(_ref_gcn(h_v, VU_adj, p["w4"], p["b4"], alpha), 0.0)
    return u, v


# ----------------------------------- main ---------------------------------- #
if __name__ == "__main__":
    n_users, n_items, feat_dim = 64, 48, 32
    alpha = 0.2  # opt['leaky']
    key = jax.random.PRNGKey(0)
    ks = jax.random.split(key, 12)

    ufea = jax.random.normal(ks[0], (n_users, feat_dim), jnp.float32)
    vfea = jax.random.normal(ks[1], (n_items, feat_dim), jnp.float32)
    # dense (row-normalized-ish) bipartite adjacencies
    UV_adj = jax.random.uniform(ks[2], (n_users, n_items), jnp.float32) / n_items
    VU_adj = jax.random.uniform(ks[3], (n_items, n_users), jnp.float32) / n_users

    # GraphConvolution-style init: uniform(-stdv, stdv), stdv = 1/sqrt(D)
    stdv = 1.0 / jnp.sqrt(jnp.float32(feat_dim))
    params = {}
    for i in range(4):
        params[f"w{i + 1}"] = jax.random.uniform(
            ks[4 + 2 * i], (feat_dim, feat_dim), jnp.float32, -stdv, stdv)
        params[f"b{i + 1}"] = jax.random.uniform(
            ks[5 + 2 * i], (feat_dim,), jnp.float32, -stdv, stdv)

    user_ho, item_ho = jax.block_until_ready(
        dgcn_layer_forward(ufea, vfea, UV_adj, VU_adj, params, alpha=alpha))

    u_ref, v_ref = _ref_forward(ufea, vfea, UV_adj, VU_adj, params, alpha)
    assert user_ho.shape == (n_users, feat_dim)
    assert item_ho.shape == (n_items, feat_dim)
    assert jnp.allclose(user_ho, u_ref, atol=1e-5, rtol=1e-5)
    assert jnp.allclose(item_ho, v_ref, atol=1e-5, rtol=1e-5)
    print("KERNEL_OK")
</pallas_src>

<mosaic_0001>
module attributes {stable_mosaic.version = 11 : i64} {
  func.func @_dgcn_fused_kernel(%arg0: i32, %arg1: memref<64x128xf32, #tpu.memory_space<vmem>>, %arg2: memref<48x128xf32, #tpu.memory_space<vmem>>, %arg3: memref<64x48xf32, #tpu.memory_space<vmem>>, %arg4: memref<48x64xf32, #tpu.memory_space<vmem>>, %arg5: memref<128x128xf32, #tpu.memory_space<vmem>>, %arg6: memref<128x128xf32, #tpu.memory_space<vmem>>, %arg7: memref<128x128xf32, #tpu.memory_space<vmem>>, %arg8: memref<128x128xf32, #tpu.memory_space<vmem>>, %arg9: memref<1x128xf32, #tpu.memory_space<vmem>>, %arg10: memref<1x128xf32, #tpu.memory_space<vmem>>, %arg11: memref<1x128xf32, #tpu.memory_space<vmem>>, %arg12: memref<1x128xf32, #tpu.memory_space<vmem>>, %arg13: memref<64x128xf32, #tpu.memory_space<vmem>>, %arg14: memref<48x128xf32, #tpu.memory_space<vmem>>) attributes {dimension_semantics = [#tpu.dimension_semantics<arbitrary>], iteration_bounds = array<i64: 1>, scalar_prefetch = 0 : i64, scratch_operands = 0 : i64, tpu.core_type = #tpu.core_type<tc>, window_params = [{pipeline_mode = #tpu.pipeline_mode<synchronous>, transform_indices = @transform_0, window_bounds = array<i64: 64, 128>}, {pipeline_mode = #tpu.pipeline_mode<synchronous>, transform_indices = @transform_1, window_bounds = array<i64: 48, 128>}, {pipeline_mode = #tpu.pipeline_mode<synchronous>, transform_indices = @transform_2, window_bounds = array<i64: 64, 48>}, {pipeline_mode = #tpu.pipeline_mode<synchronous>, transform_indices = @transform_3, window_bounds = array<i64: 48, 64>}, {pipeline_mode = #tpu.pipeline_mode<synchronous>, transform_indices = @transform_4, window_bounds = array<i64: 128, 128>}, {pipeline_mode = #tpu.pipeline_mode<synchronous>, transform_indices = @transform_5, window_bounds = array<i64: 128, 128>}, {pipeline_mode = #tpu.pipeline_mode<synchronous>, transform_indices = @transform_6, window_bounds = array<i64: 128, 128>}, {pipeline_mode = #tpu.pipeline_mode<synchronous>, transform_indices = @transform_7, window_bounds = array<i64: 128, 128>}, {pipeline_mode = #tpu.pipeline_mode<synchronous>, transform_indices = @transform_8, window_bounds = array<i64: 1, 128>}, {pipeline_mode = #tpu.pipeline_mode<synchronous>, transform_indices = @transform_9, window_bounds = array<i64: 1, 128>}, {pipeline_mode = #tpu.pipeline_mode<synchronous>, transform_indices = @transform_10, window_bounds = array<i64: 1, 128>}, {pipeline_mode = #tpu.pipeline_mode<synchronous>, transform_indices = @transform_11, window_bounds = array<i64: 1, 128>}, {pipeline_mode = #tpu.pipeline_mode<synchronous>, transform_indices = @transform_12, window_bounds = array<i64: 64, 128>}, {pipeline_mode = #tpu.pipeline_mode<synchronous>, transform_indices = @transform_13, window_bounds = array<i64: 48, 128>}]} {
    %c0 = arith.constant 0 : index
    %c0_0 = arith.constant 0 : index
    %0 = vector.load %arg3[%c0, %c0_0] : memref<64x48xf32, #tpu.memory_space<vmem>>, vector<64x48xf32>
    %c0_1 = arith.constant 0 : index
    %c0_2 = arith.constant 0 : index
    %1 = vector.load %arg4[%c0_1, %c0_2] : memref<48x64xf32, #tpu.memory_space<vmem>>, vector<48x64xf32>
    %c0_3 = arith.constant 0 : index
    %c0_4 = arith.constant 0 : index
    %2 = vector.load %arg1[%c0_3, %c0_4] : memref<64x128xf32, #tpu.memory_space<vmem>>, vector<64x128xf32>
    %c0_5 = arith.constant 0 : index
    %c0_6 = arith.constant 0 : index
    %3 = vector.load %arg5[%c0_5, %c0_6] : memref<128x128xf32, #tpu.memory_space<vmem>>, vector<128x128xf32>
    %cst = arith.constant dense<0.000000e+00> : vector<64x128xf32>
    %4 = tpu.matmul %2, %3, %cst {dimension_numbers = #tpu.dot_dimension_numbers<[1], [0], [0], [1], [0, 0, 1, 1], [], []>} : vector<64x128xf32>, vector<128x128xf32>, vector<64x128xf32> -> vector<64x128xf32>
    %cst_7 = arith.constant dense<0.000000e+00> : vector<48x128xf32>
    %5 = tpu.matmul %1, %4, %cst_7 {dimension_numbers = #tpu.dot_dimension_numbers<[1], [0], [0], [1], [0, 0, 1, 1], [], []>} : vector<48x64xf32>, vector<64x128xf32>, vector<48x128xf32> -> vector<48x128xf32>
    %c0_8 = arith.constant 0 : index
    %c0_9 = arith.constant 0 : index
    %6 = vector.load %arg9[%c0_8, %c0_9] : memref<1x128xf32, #tpu.memory_space<vmem>>, vector<1x128xf32>
    %7 = vector.broadcast %6 : vector<1x128xf32> to vector<48x128xf32>
    %8 = arith.addf %5, %7 : vector<48x128xf32>
    %cst_10 = arith.constant 0.000000e+00 : f32
    %9 = vector.broadcast %cst_10 : f32 to vector<48x128xf32>
    %10 = arith.cmpf ogt, %8, %9 : vector<48x128xf32>
    %cst_11 = arith.constant 2.000000e-01 : f32
    %11 = vector.broadcast %cst_11 : f32 to vector<48x128xf32>
    %12 = arith.mulf %11, %8 : vector<48x128xf32>
    %13 = arith.select %10, %8, %12 : vector<48x128xi1>, vector<48x128xf32>
    %c0_12 = arith.constant 0 : index
    %c0_13 = arith.constant 0 : index
    %14 = vector.load %arg2[%c0_12, %c0_13] : memref<48x128xf32, #tpu.memory_space<vmem>>, vector<48x128xf32>
    %c0_14 = arith.constant 0 : index
    %c0_15 = arith.constant 0 : index
    %15 = vector.load %arg6[%c0_14, %c0_15] : memref<128x128xf32, #tpu.memory_space<vmem>>, vector<128x128xf32>
    %cst_16 = arith.constant dense<0.000000e+00> : vector<48x128xf32>
    %16 = tpu.matmul %14, %15, %cst_16 {dimension_numbers = #tpu.dot_dimension_numbers<[1], [0], [0], [1], [0, 0, 1, 1], [], []>} : vector<48x128xf32>, vector<128x128xf32>, vector<48x128xf32> -> vector<48x128xf32>
    %cst_17 = arith.constant dense<0.000000e+00> : vector<64x128xf32>
    %17 = tpu.matmul %0, %16, %cst_17 {dimension_numbers = #tpu.dot_dimension_numbers<[1], [0], [0], [1], [0, 0, 1, 1], [], []>} : vector<64x48xf32>, vector<48x128xf32>, vector<64x128xf32> -> vector<64x128xf32>
    %c0_18 = arith.constant 0 : index
    %c0_19 = arith.constant 0 : index
    %18 = vector.load %arg10[%c0_18, %c0_19] : memref<1x128xf32, #tpu.memory_space<vmem>>, vector<1x128xf32>
    %19 = vector.broadcast %18 : vector<1x128xf32> to vector<64x128xf32>
    %20 = arith.addf %17, %19 : vector<64x128xf32>
    %cst_20 = arith.constant 0.000000e+00 : f32
    %21 = vector.broadcast %cst_20 : f32 to vector<64x128xf32>
    %22 = arith.cmpf ogt, %20, %21 : vector<64x128xf32>
    %cst_21 = arith.constant 2.000000e-01 : f32
    %23 = vector.broadcast %cst_21 : f32 to vector<64x128xf32>
    %24 = arith.mulf %23, %20 : vector<64x128xf32>
    %25 = arith.select %22, %20, %24 : vector<64x128xi1>, vector<64x128xf32>
    %c0_22 = arith.constant 0 : index
    %c0_23 = arith.constant 0 : index
    %26 = vector.load %arg7[%c0_22, %c0_23] : memref<128x128xf32, #tpu.memory_space<vmem>>, vector<128x128xf32>
    %cst_24 = arith.constant dense<0.000000e+00> : vector<48x128xf32>
    %27 = tpu.matmul %13, %26, %cst_24 {dimension_numbers = #tpu.dot_dimension_numbers<[1], [0], [0], [1], [0, 0, 1, 1], [], []>} : vector<48x128xf32>, vector<128x128xf32>, vector<48x128xf32> -> vector<48x128xf32>
    %cst_25 = arith.constant dense<0.000000e+00> : vector<64x128xf32>
    %28 = tpu.matmul %0, %27, %cst_25 {dimension_numbers = #tpu.dot_dimension_numbers<[1], [0], [0], [1], [0, 0, 1, 1], [], []>} : vector<64x48xf32>, vector<48x128xf32>, vector<64x128xf32> -> vector<64x128xf32>
    %c0_26 = arith.constant 0 : index
    %c0_27 = arith.constant 0 : index
    %29 = vector.load %arg11[%c0_26, %c0_27] : memref<1x128xf32, #tpu.memory_space<vmem>>, vector<1x128xf32>
    %30 = vector.broadcast %29 : vector<1x128xf32> to vector<64x128xf32>
    %31 = arith.addf %28, %30 : vector<64x128xf32>
    %cst_28 = arith.constant 0.000000e+00 : f32
    %32 = vector.broadcast %cst_28 : f32 to vector<64x128xf32>
    %33 = arith.maximumf %31, %32 : vector<64x128xf32>
    %c0_29 = arith.constant 0 : index
    %c0_30 = arith.constant 0 : index
    %34 = vector.load %arg13[%c0_29, %c0_30] : memref<64x128xf32, #tpu.memory_space<vmem>>, vector<64x128xf32>
    tpu.vector_store %arg13[%c0_29, %c0_30], %33 {strides = array<i32>} : memref<64x128xf32, #tpu.memory_space<vmem>>, vector<64x128xf32>,
    %c0_31 = arith.constant 0 : index
    %c0_32 = arith.constant 0 : index
    %35 = vector.load %arg8[%c0_31, %c0_32] : memref<128x128xf32, #tpu.memory_space<vmem>>, vector<128x128xf32>
    %cst_33 = arith.constant dense<0.000000e+00> : vector<64x128xf32>
    %36 = tpu.matmul %25, %35, %cst_33 {dimension_numbers = #tpu.dot_dimension_numbers<[1], [0], [0], [1], [0, 0, 1, 1], [], []>} : vector<64x128xf32>, vector<128x128xf32>, vector<64x128xf32> -> vector<64x128xf32>
    %cst_34 = arith.constant dense<0.000000e+00> : vector<48x128xf32>
    %37 = tpu.matmul %1, %36, %cst_34 {dimension_numbers = #tpu.dot_dimension_numbers<[1], [0], [0], [1], [0, 0, 1, 1], [], []>} : vector<48x64xf32>, vector<64x128xf32>, vector<48x128xf32> -> vector<48x128xf32>
    %c0_35 = arith.constant 0 : index
    %c0_36 = arith.constant 0 : index
    %38 = vector.load %arg12[%c0_35, %c0_36] : memref<1x128xf32, #tpu.memory_space<vmem>>, vector<1x128xf32>
    %39 = vector.broadcast %38 : vector<1x128xf32> to vector<48x128xf32>
    %40 = arith.addf %37, %39 : vector<48x128xf32>
    %cst_37 = arith.constant 0.000000e+00 : f32
    %41 = vector.broadcast %cst_37 : f32 to vector<48x128xf32>
    %42 = arith.maximumf %40, %41 : vector<48x128xf32>
    %c0_38 = arith.constant 0 : index
    %c0_39 = arith.constant 0 : index
    %43 = vector.load %arg14[%c0_38, %c0_39] : memref<48x128xf32, #tpu.memory_space<vmem>>, vector<48x128xf32>
    tpu.vector_store %arg14[%c0_38, %c0_39], %42 {strides = array<i32>} : memref<48x128xf32, #tpu.memory_space<vmem>>, vector<48x128xf32>,
    return
  }
  func.func @transform_0(%arg0: i32) -> (i32, i32) {
    %c0_i32 = arith.constant 0 : i32
    %c0_i32_0 = arith.constant 0 : i32
    %c0_i32_1 = arith.constant 0 : i32
    return %c0_i32, %c0_i32_0 : i32, i32
  }
  func.func @transform_1(%arg0: i32) -> (i32, i32) {
    %c0_i32 = arith.constant 0 : i32
    %c0_i32_0 = arith.constant 0 : i32
    %c0_i32_1 = arith.constant 0 : i32
    return %c0_i32, %c0_i32_0 : i32, i32
  }
  func.func @transform_2(%arg0: i32) -> (i32, i32) {
    %c0_i32 = arith.constant 0 : i32
    %c0_i32_0 = arith.constant 0 : i32
    %c0_i32_1 = arith.constant 0 : i32
    return %c0_i32, %c0_i32_0 : i32, i32
  }
  func.func @transform_3(%arg0: i32) -> (i32, i32) {
    %c0_i32 = arith.constant 0 : i32
    %c0_i32_0 = arith.constant 0 : i32
    %c0_i32_1 = arith.constant 0 : i32
    return %c0_i32, %c0_i32_0 : i32, i32
  }
  func.func @transform_4(%arg0: i32) -> (i32, i32) {
    %c0_i32 = arith.constant 0 : i32
    %c0_i32_0 = arith.constant 0 : i32
    %c0_i32_1 = arith.constant 0 : i32
    return %c0_i32, %c0_i32_0 : i32, i32
  }
  func.func @transform_5(%arg0: i32) -> (i32, i32) {
    %c0_i32 = arith.constant 0 : i32
    %c0_i32_0 = arith.constant 0 : i32
    %c0_i32_1 = arith.constant 0 : i32
    return %c0_i32, %c0_i32_0 : i32, i32
  }
  func.func @transform_6(%arg0: i32) -> (i32, i32) {
    %c0_i32 = arith.constant 0 : i32
    %c0_i32_0 = arith.constant 0 : i32
    %c0_i32_1 = arith.constant 0 : i32
    return %c0_i32, %c0_i32_0 : i32, i32
  }
  func.func @transform_7(%arg0: i32) -> (i32, i32) {
    %c0_i32 = arith.constant 0 : i32
    %c0_i32_0 = arith.constant 0 : i32
    %c0_i32_1 = arith.constant 0 : i32
    return %c0_i32, %c0_i32_0 : i32, i32
  }
  func.func @transform_8(%arg0: i32) -> (i32, i32) {
    %c0_i32 = arith.constant 0 : i32
    %c0_i32_0 = arith.constant 0 : i32
    %c0_i32_1 = arith.constant 0 : i32
    return %c0_i32, %c0_i32_0 : i32, i32
  }
  func.func @transform_9(%arg0: i32) -> (i32, i32) {
    %c0_i32 = arith.constant 0 : i32
    %c0_i32_0 = arith.constant 0 : i32
    %c0_i32_1 = arith.constant 0 : i32
    return %c0_i32, %c0_i32_0 : i32, i32
  }
  func.func @transform_10(%arg0: i32) -> (i32, i32) {
    %c0_i32 = arith.constant 0 : i32
    %c0_i32_0 = arith.constant 0 : i32
    %c0_i32_1 = arith.constant 0 : i32
    return %c0_i32, %c0_i32_0 : i32, i32
  }
  func.func @transform_11(%arg0: i32) -> (i32, i32) {
    %c0_i32 = arith.constant 0 : i32
    %c0_i32_0 = arith.constant 0 : i32
    %c0_i32_1 = arith.constant 0 : i32
    return %c0_i32, %c0_i32_0 : i32, i32
  }
  func.func @transform_12(%arg0: i32) -> (i32, i32) {
    %c0_i32 = arith.constant 0 : i32
    %c0_i32_0 = arith.constant 0 : i32
    %c0_i32_1 = arith.constant 0 : i32
    return %c0_i32, %c0_i32_0 : i32, i32
  }
  func.func @transform_13(%arg0: i32) -> (i32, i32) {
    %c0_i32 = arith.constant 0 : i32
    %c0_i32_0 = arith.constant 0 : i32
    %c0_i32_1 = arith.constant 0 : i32
    return %c0_i32, %c0_i32_0 : i32, i32
  }
}

</mosaic_0001>

<llo_original>
// kernel: tpu_custom_call.1
$region0: #{tpu_custom_call.1}
  #allocation0 [shape = 'u32[]', space=smem, size = 0x4, offset = 0x4, fixed_abs, tag = 'smem constant byte address 0x4 - core index']
  #allocation1 [shape = 'u32[144,128]{1,0:T(1,128)}', space=vmem, size = 0x12000, scoped, tag = 'internal scratch']
  %s0 = inlined_call_operand.vmem [shape: f32[64,128], index: 0, kind: input, shape index: {}]
  %s1 = inlined_call_operand.vmem [shape: f32[48,128], index: 1, kind: input, shape index: {}]
  %s2 = inlined_call_operand.vmem [shape: f32[64,48], index: 2, kind: input, shape index: {}]
  %s3 = inlined_call_operand.hbm [shape: f32[48,64], index: 3, kind: input, shape index: {}]
  %s4 = inlined_call_operand.hbm [shape: f32[128,128], index: 4, kind: input, shape index: {}]
  %s5 = inlined_call_operand.hbm [shape: f32[128,128], index: 5, kind: input, shape index: {}]
  %s6 = inlined_call_operand.hbm [shape: f32[128,128], index: 6, kind: input, shape index: {}]
  %s7 = inlined_call_operand.hbm [shape: f32[128,128], index: 7, kind: input, shape index: {}]
  %s8 = inlined_call_operand.vmem [shape: f32[1,128], index: 8, kind: input, shape index: {}]
  %s9 = inlined_call_operand.vmem [shape: f32[1,128], index: 9, kind: input, shape index: {}]
  %s10 = inlined_call_operand.vmem [shape: f32[1,128], index: 10, kind: input, shape index: {}]
  %s11 = inlined_call_operand.vmem [shape: f32[1,128], index: 11, kind: input, shape index: {}]
  %s12 = inlined_call_operand.hbm [shape: f32[64,128], index: 12, kind: output, shape index: {0}]
  %s13 = inlined_call_operand.hbm [shape: f32[48,128], index: 13, kind: output, shape index: {1}]
  %14 = xla_tuple %s12, %s13
  %s15 = sld [smem:[#allocation0]]
  $region86: #{tpu_custom_call.1} parent=0
    _
  %s17 = ssub.s32 1, %s15
  %s18 = scalar_select 0, %s17, %s15
  $region1: #{tpu_custom_call.1} parent=0
    #allocation2 [shape = 'u8[24576]{0}', space=vmem, size = 0x6000, scoped, tag = 'input window, operand 3, single buffered']
    #allocation3 [shape = 's32[1]{0}', space=sflag, size = 0x4, scoped, tag = 'scoped memory for tpu_custom_call.1']
    #allocation4 [shape = 's32[1]{0}', space=sflag, size = 0x4, scoped, tag = 'scoped memory for tpu_custom_call.1']
    #allocation5 [shape = 'u8[65536]{0}', space=vmem, size = 0x10000, scoped, tag = 'input window, operand 4, single buffered']
    #allocation6 [shape = 's32[1]{0}', space=sflag, size = 0x4, scoped, tag = 'scoped memory for tpu_custom_call.1']
    #allocation7 [shape = 'u8[65536]{0}', space=vmem, size = 0x10000, scoped, tag = 'input window, operand 5, single buffered']
    #allocation8 [shape = 'u8[65536]{0}', space=vmem, size = 0x10000, scoped, tag = 'input window, operand 6, single buffered']
    #allocation9 [shape = 's32[1]{0}', space=sflag, size = 0x4, scoped, tag = 'scoped memory for tpu_custom_call.1']
    #allocation10 [shape = 'u8[65536]{0}', space=vmem, size = 0x10000, scoped, tag = 'input window, operand 7, single buffered']
    #allocation11 [shape = 'u8[32768]{0}', space=vmem, size = 0x8000, scoped, tag = 'output window, operand 0, single buffered']
    #allocation12 [shape = 'u8[24576]{0}', space=vmem, size = 0x6000, scoped, tag = 'output window, operand 1, single buffered']
    #allocation13 [shape = 's32[1]{0}', space=sflag, size = 0x4, scoped, tag = 'scoped memory for tpu_custom_call.1']
    %19 = vsyncpa [#allocation3], 0
    %20 = vsyncpa [#allocation6], 0
    %21 = vsyncpa [#allocation9], 0
    %22 = vsyncpa [#allocation4], 0
    %23 = vsyncpa [#allocation13], 0
    // Predicated region
    $region2: #{tpu_custom_call.1} parent=1 // pred_check
      _
    $region3: #{tpu_custom_call.1} parent=1 // pred_check_branch
      %25 = sbr.rel (0) target = $region5
    $region4: #{tpu_custom_call.1} parent=1 // pred_region
      _
    $region5: #{tpu_custom_call.1} parent=1 // pred_fallthru
      _
    // Predicated region
    $region6: #{tpu_custom_call.1} parent=1 // pred_check
      _
    $region7: #{tpu_custom_call.1} parent=1 // pred_check_branch
      %27 = sbr.rel (0) target = $region9
    $region8: #{tpu_custom_call.1} parent=1 // pred_region
      _
    $region9: #{tpu_custom_call.1} parent=1 // pred_fallthru
      _
    // Predicated region
    $region10: #{tpu_custom_call.1} parent=1 // pred_check
      _
    $region11: #{tpu_custom_call.1} parent=1 // pred_check_branch
      %29 = sbr.rel (0) target = $region13
    $region12: #{tpu_custom_call.1} parent=1 // pred_region
      _
    $region13: #{tpu_custom_call.1} parent=1 // pred_fallthru
      _
    // Predicated region
    $region14: #{tpu_custom_call.1} parent=1 // pred_check
      _
    $region15: #{tpu_custom_call.1} parent=1 // pred_check_branch
      %31 = sbr.rel (0) target = $region17
    $region16: #{tpu_custom_call.1} parent=1 // pred_region
      %s33 = ssub.s32 768, 768
      %34 = vsyncadd [#allocation3], %s33
      %s35 = sshll.u32 [#allocation2], 4
      %s36 = int_to_ptr.vmem [resolvable:$true] %s35
      %41 = dma.hbm_to_vmem [thread:$0]  %s3, 768, %s36, [#allocation3], 128, 128, 8
    $region17: #{tpu_custom_call.1} parent=1 // pred_fallthru
      _
    // Predicated region
    $region18: #{tpu_custom_call.1} parent=1 // pred_check
      _
    $region19: #{tpu_custom_call.1} parent=1 // pred_check_branch
      %43 = sbr.rel (0) target = $region21
    $region20: #{tpu_custom_call.1} parent=1 // pred_region
      %s45 = ssub.s32 2048, 2048
      %46 = vsyncadd [#allocation6], %s45
      %s47 = sshll.u32 [#allocation5], 4
      %s48 = int_to_ptr.vmem [resolvable:$true] %s47
      %53 = dma.hbm_to_vmem [thread:$0]  %s4, 2048, %s48, [#allocation6], 128, 128, 8
    $region21: #{tpu_custom_call.1} parent=1 // pred_fallthru
      _
    // Predicated region
    $region22: #{tpu_custom_call.1} parent=1 // pred_check
      _
    $region23: #{tpu_custom_call.1} parent=1 // pred_check_branch
      %55 = sbr.rel (0) target = $region25
    $region24: #{tpu_custom_call.1} parent=1 // pred_region
      %s57 = ssub.s32 2048, 2048
      %58 = vsyncadd [#allocation6], %s57
      %s59 = sshll.u32 [#allocation7], 4
      %s60 = int_to_ptr.vmem [resolvable:$true] %s59
      %65 = dma.hbm_to_vmem [thread:$0]  %s5, 2048, %s60, [#allocation6], 128, 128, 8
    $region25: #{tpu_custom_call.1} parent=1 // pred_fallthru
      _
    // Predicated region
    $region26: #{tpu_custom_call.1} parent=1 // pred_check
      _
    $region27: #{tpu_custom_call.1} parent=1 // pred_check_branch
      %67 = sbr.rel (0) target = $region29
    $region28: #{tpu_custom_call.1} parent=1 // pred_region
      %s69 = ssub.s32 2048, 2048
      %70 = vsyncadd [#allocation9], %s69
      %s71 = sshll.u32 [#allocation8], 4
      %s72 = int_to_ptr.vmem [resolvable:$true] %s71
      %77 = dma.hbm_to_vmem [thread:$0]  %s6, 2048, %s72, [#allocation9], 128, 128, 8
    $region29: #{tpu_custom_call.1} parent=1 // pred_fallthru
      _
    // Predicated region
    $region30: #{tpu_custom_call.1} parent=1 // pred_check
      _
    $region31: #{tpu_custom_call.1} parent=1 // pred_check_branch
      %79 = sbr.rel (0) target = $region33
    $region32: #{tpu_custom_call.1} parent=1 // pred_region
      %s81 = ssub.s32 2048, 2048
      %82 = vsyncadd [#allocation9], %s81
      %s83 = sshll.u32 [#allocation10], 4
      %s84 = int_to_ptr.vmem [resolvable:$true] %s83
      %89 = dma.hbm_to_vmem [thread:$0]  %s7, 2048, %s84, [#allocation9], 128, 128, 8
    $region33: #{tpu_custom_call.1} parent=1 // pred_fallthru
      _
    // Predicated region
    $region34: #{tpu_custom_call.1} parent=1 // pred_check
      _
    $region35: #{tpu_custom_call.1} parent=1 // pred_check_branch
      %91 = sbr.rel (0) target = $region37
    $region36: #{tpu_custom_call.1} parent=1 // pred_region
      _
    $region37: #{tpu_custom_call.1} parent=1 // pred_fallthru
      _
    // Predicated region
    $region38: #{tpu_custom_call.1} parent=1 // pred_check
      _
    $region39: #{tpu_custom_call.1} parent=1 // pred_check_branch
      %93 = sbr.rel (0) target = $region41
    $region40: #{tpu_custom_call.1} parent=1 // pred_region
      _
    $region41: #{tpu_custom_call.1} parent=1 // pred_fallthru
      _
    // Predicated region
    $region42: #{tpu_custom_call.1} parent=1 // pred_check
      _
    $region43: #{tpu_custom_call.1} parent=1 // pred_check_branch
      %95 = sbr.rel (0) target = $region45
    $region44: #{tpu_custom_call.1} parent=1 // pred_region
      _
    $region45: #{tpu_custom_call.1} parent=1 // pred_fallthru
      _
    // Predicated region
    $region46: #{tpu_custom_call.1} parent=1 // pred_check
      _
    $region47: #{tpu_custom_call.1} parent=1 // pred_check_branch
      %97 = sbr.rel (0) target = $region49
    $region48: #{tpu_custom_call.1} parent=1 // pred_region
      _
    $region49: #{tpu_custom_call.1} parent=1 // pred_fallthru
      _
    // Predicated region
    $region50: #{tpu_custom_call.1} parent=1 // pred_check
      _
    $region51: #{tpu_custom_call.1} parent=1 // pred_check_branch
      %99 = sbr.rel (0) target = $region53
    $region52: #{tpu_custom_call.1} parent=1 // pred_region
      %100 = dma.done [#allocation3], 768
    $region53: #{tpu_custom_call.1} parent=1 // pred_fallthru
      _
    // Predicated region
    $region54: #{tpu_custom_call.1} parent=1 // pred_check
      _
    $region55: #{tpu_custom_call.1} parent=1 // pred_check_branch
      %102 = sbr.rel (0) target = $region57
    $region56: #{tpu_custom_call.1} parent=1 // pred_region
      %103 = dma.done [#allocation6], 2048
    $region57: #{tpu_custom_call.1} parent=1 // pred_fallthru
      _
    // Predicated region
    $region58: #{tpu_custom_call.1} parent=1 // pred_check
      _
    $region59: #{tpu_custom_call.1} parent=1 // pred_check_branch
      %105 = sbr.rel (0) target = $region61
    $region60: #{tpu_custom_call.1} parent=1 // pred_region
      %106 = dma.done [#allocation6], 2048
    $region61: #{tpu_custom_call.1} parent=1 // pred_fallthru
      _
    // Predicated region
    $region62: #{tpu_custom_call.1} parent=1 // pred_check
      _
    $region63: #{tpu_custom_call.1} parent=1 // pred_check_branch
      %108 = sbr.rel (0) target = $region65
    $region64: #{tpu_custom_call.1} parent=1 // pred_region
      %109 = dma.done [#allocation9], 2048
    $region65: #{tpu_custom_call.1} parent=1 // pred_fallthru
      _
    // Predicated region
    $region66: #{tpu_custom_call.1} parent=1 // pred_check
      _
    $region67: #{tpu_custom_call.1} parent=1 // pred_check_branch
      %111 = sbr.rel (0) target = $region69
    $region68: #{tpu_custom_call.1} parent=1 // pred_region
      %112 = dma.done [#allocation9], 2048
    $region69: #{tpu_custom_call.1} parent=1 // pred_fallthru
      _
    %v113 = vld [vmem:[%s2] sm:$0xff]
    %v114 = vld [vmem:[%s2 + $0x8] sm:$0xff]
    %v115 = vld [vmem:[%s2 + $0x10] sm:$0xff]
    %v116 = vld [vmem:[%s2 + $0x18] sm:$0xff]
    %v117 = vld [vmem:[%s2 + $0x20] sm:$0xff]
    %v118 = vld [vmem:[%s2 + $0x28] sm:$0xff]
    %v119 = vld [vmem:[%s2 + $0x30] sm:$0xff]
    %v120 = vld [vmem:[%s2 + $0x38] sm:$0xff]
    %v121 = vld [vmem:[#allocation2] sm:$0xff]
    %v122 = vld [vmem:[#allocation2 + $0x8] sm:$0xff]
    %v123 = vld [vmem:[#allocation2 + $0x10] sm:$0xff]
    %v124 = vld [vmem:[#allocation2 + $0x18] sm:$0xff]
    %v125 = vld [vmem:[#allocation2 + $0x20] sm:$0xff]
    %v126 = vld [vmem:[#allocation2 + $0x28] sm:$0xff]
    %v127 = vld [vmem:[%s0] sm:$0xff]
    %v128 = vld [vmem:[%s0 + $0x8] sm:$0xff]
    %v129 = vld [vmem:[%s0 + $0x10] sm:$0xff]
    %v130 = vld [vmem:[%s0 + $0x18] sm:$0xff]
    %v131 = vld [vmem:[%s0 + $0x20] sm:$0xff]
    %v132 = vld [vmem:[%s0 + $0x28] sm:$0xff]
    %v133 = vld [vmem:[%s0 + $0x30] sm:$0xff]
    %v134 = vld [vmem:[%s0 + $0x38] sm:$0xff]
    %v135 = vld [vmem:[#allocation5] sm:$0xff]
    %v136 = vld [vmem:[#allocation5 + $0x8] sm:$0xff]
    %v137 = vld [vmem:[#allocation5 + $0x10] sm:$0xff]
    %v138 = vld [vmem:[#allocation5 + $0x18] sm:$0xff]
    %v139 = vld [vmem:[#allocation5 + $0x20] sm:$0xff]
    %v140 = vld [vmem:[#allocation5 + $0x28] sm:$0xff]
    %v141 = vld [vmem:[#allocation5 + $0x30] sm:$0xff]
    %v142 = vld [vmem:[#allocation5 + $0x38] sm:$0xff]
    %v143 = vld [vmem:[#allocation5 + $0x40] sm:$0xff]
    %v144 = vld [vmem:[#allocation5 + $0x48] sm:$0xff]
    %v145 = vld [vmem:[#allocation5 + $0x50] sm:$0xff]
    %v146 = vld [vmem:[#allocation5 + $0x58] sm:$0xff]
    %v147 = vld [vmem:[#allocation5 + $0x60] sm:$0xff]
    %v148 = vld [vmem:[#allocation5 + $0x68] sm:$0xff]
    %v149 = vld [vmem:[#allocation5 + $0x70] sm:$0xff]
    %v150 = vld [vmem:[#allocation5 + $0x78] sm:$0xff]
    %151 = vmatprep.subr.mxu0 0.0
    %152 = vmatpush1.msra.mxu0 %v150
    %153 = vmatprep.subr.mxu0 0.0
    %154 = vmatpush1.msra.mxu0 %v149
    %155 = vmatprep.subr.mxu0 0.0
    %156 = vmatpush1.msra.mxu0 %v148
    %157 = vmatprep.subr.mxu0 0.0
    %158 = vmatpush1.msra.mxu0 %v147
    %159 = vmatprep.subr.mxu0 0.0
    %160 = vmatpush1.msra.mxu0 %v146
    %161 = vmatprep.subr.mxu0 0.0
    %162 = vmatpush1.msra.mxu0 %v145
    %163 = vmatprep.subr.mxu0 0.0
    %164 = vmatpush1.msra.mxu0 %v144
    %165 = vmatprep.subr.mxu0 0.0
    %166 = vmatpush1.msra.mxu0 %v143
    %167 = vmatprep.subr.mxu0 0.0
    %168 = vmatpush1.msra.mxu0 %v142
    %169 = vmatprep.subr.mxu0 0.0
    %170 = vmatpush1.msra.mxu0 %v141
    %171 = vmatprep.subr.mxu0 0.0
    %172 = vmatpush1.msra.mxu0 %v140
    %173 = vmatprep.subr.mxu0 0.0
    %174 = vmatpush1.msra.mxu0 %v139
    %175 = vmatprep.subr.mxu0 0.0
    %176 = vmatpush1.msra.mxu0 %v138
    %177 = vmatprep.subr.mxu0 0.0
    %178 = vmatpush1.msra.mxu0 %v137
    %179 = vmatprep.subr.mxu0 0.0
    %180 = vmatpush1.msra.mxu0 %v136
    %181 = vmatprep.subr.mxu0 0.0
    %182 = vmatpush1.msra.mxu0 %v135
    %183 = vmatprep.subr.mxu0 0.0
    %184 = vmatpush2.msra.mxu0 0.0
    %185 = vmatprep.subr.mxu0 0.0
    %186 = vmatpush2.msra.mxu0 0.0
    %187 = vmatprep.subr.mxu0 0.0
    %188 = vmatpush2.msra.mxu0 0.0
    %189 = vmatprep.subr.mxu0 0.0
    %190 = vmatpush2.msra.mxu0 0.0
    %191 = vmatprep.subr.mxu0 0.0
    %192 = vmatpush2.msra.mxu0 0.0
    %193 = vmatprep.subr.mxu0 0.0
    %194 = vmatpush2.msra.mxu0 0.0
    %195 = vmatprep.subr.mxu0 0.0
    %196 = vmatpush2.msra.mxu0 0.0
    %197 = vmatprep.subr.mxu0 0.0
    %198 = vmatpush2.msra.mxu0 0.0
    %199 = vmatprep.subr.mxu0 0.0
    %200 = vmatpush2.msra.mxu0 0.0
    %201 = vmatprep.subr.mxu0 0.0
    %202 = vmatpush2.msra.mxu0 0.0
    %203 = vmatprep.subr.mxu0 0.0
    %204 = vmatpush2.msra.mxu0 0.0
    %205 = vmatprep.subr.mxu0 0.0
    %206 = vmatpush2.msra.mxu0 0.0
    %207 = vmatprep.subr.mxu0 0.0
    %208 = vmatpush2.msra.mxu0 0.0
    %209 = vmatprep.subr.mxu0 0.0
    %210 = vmatpush2.msra.mxu0 0.0
    %211 = vmatprep.subr.mxu0 0.0
    %212 = vmatpush2.msra.mxu0 0.0
    %213 = vmatprep.subr.mxu0 0.0
    %214 = vmatpush2.msra.mxu0 0.0
    %215 = vmatprep.mubr.f32.mxu0 0.0
    %216 = vmatmul.mubr.f32.gmra.mxu0 %v127
    %v217 = vpop.f32.mrf.mxu0
    %v218 = vadd.f32 0.0, %v217
    %v219 = vpop.f32.mrf.mxu0
    %220 = vmatprep.mubr.f32.mxu0 0.0
    %221 = vmatmul.mubr.f32.gmra.mxu0 %v128
    %v222 = vpop.f32.mrf.mxu0
    %v223 = vadd.f32 0.0, %v222
    %v224 = vpop.f32.mrf.mxu0
    %225 = vmatprep.mubr.f32.mxu0 0.0
    %226 = vmatmul.mubr.f32.gmra.mxu0 %v129
    %v227 = vpop.f32.mrf.mxu0
    %v228 = vadd.f32 0.0, %v227
    %v229 = vpop.f32.mrf.mxu0
    %230 = vmatprep.mubr.f32.mxu0 0.0
    %231 = vmatmul.mubr.f32.gmra.mxu0 %v130
    %v232 = vpop.f32.mrf.mxu0
    %v233 = vadd.f32 0.0, %v232
    %v234 = vpop.f32.mrf.mxu0
    %235 = vmatprep.mubr.f32.mxu0 0.0
    %236 = vmatmul.mubr.f32.gmra.mxu0 %v131
    %v237 = vpop.f32.mrf.mxu0
    %v238 = vadd.f32 0.0, %v237
    %v239 = vpop.f32.mrf.mxu0
    %240 = vmatprep.mubr.f32.mxu0 0.0
    %241 = vmatmul.mubr.f32.gmra.mxu0 %v132
    %v242 = vpop.f32.mrf.mxu0
    %v243 = vadd.f32 0.0, %v242
    %v244 = vpop.f32.mrf.mxu0
    %245 = vmatprep.mubr.f32.mxu0 0.0
    %246 = vmatmul.mubr.f32.gmra.mxu0 %v133
    %v247 = vpop.f32.mrf.mxu0
    %v248 = vadd.f32 0.0, %v247
    %v249 = vpop.f32.mrf.mxu0
    %250 = vmatprep.mubr.f32.mxu0 0.0
    %251 = vmatmul.mubr.f32.gmra.mxu0 %v134
    %v252 = vpop.f32.mrf.mxu0
    %v253 = vadd.f32 0.0, %v252
    %v254 = vpop.f32.mrf.mxu0
    %255 = vdwg.mxu0
    %v256 = vld [vmem:[%s8] sm:$0x1]
    %v258 = vlaneseq
    %v259 = vshrl.u32 %v258, 7
    %v260 = vsub.s32 0, %v259
    %v261 = vrot.slane %v256, %v260
    %vm263 = vcmask 523264
    %v265 = vsel %vm263, %v121, 0
    %v268 = vsel %vm263, %v122, 0
    %v271 = vsel %vm263, %v123, 0
    %v274 = vsel %vm263, %v124, 0
    %v277 = vsel %vm263, %v125, 0
    %v280 = vsel %vm263, %v126, 0
    %282 = vmatprep.subr.mxu0 0.0
    %283 = vmatpush1.msra.mxu0 0.0
    %284 = vmatprep.subr.mxu0 0.0
    %285 = vmatpush1.msra.mxu0 0.0
    %286 = vmatprep.subr.mxu0 0.0
    %287 = vmatpush1.msra.mxu0 0.0
    %288 = vmatprep.subr.mxu0 0.0
    %289 = vmatpush1.msra.mxu0 0.0
    %290 = vmatprep.subr.mxu0 0.0
    %291 = vmatpush1.msra.mxu0 0.0
    %292 = vmatprep.subr.mxu0 0.0
    %293 = vmatpush1.msra.mxu0 0.0
    %294 = vmatprep.subr.mxu0 0.0
    %295 = vmatpush1.msra.mxu0 0.0
    %296 = vmatprep.subr.mxu0 0.0
    %297 = vmatpush1.msra.mxu0 0.0
    %298 = vmatprep.subr.mxu0 0.0
    %299 = vmatpush1.msra.mxu0 %v253
    %300 = vmatprep.subr.mxu0 0.0
    %301 = vmatpush1.msra.mxu0 %v248
    %302 = vmatprep.subr.mxu0 0.0
    %303 = vmatpush1.msra.mxu0 %v243
    %304 = vmatprep.subr.mxu0 0.0
    %305 = vmatpush1.msra.mxu0 %v238
    %306 = vmatprep.subr.mxu0 0.0
    %307 = vmatpush1.msra.mxu0 %v233
    %308 = vmatprep.subr.mxu0 0.0
    %309 = vmatpush1.msra.mxu0 %v228
    %310 = vmatprep.subr.mxu0 0.0
    %311 = vmatpush1.msra.mxu0 %v223
    %312 = vmatprep.subr.mxu0 0.0
    %313 = vmatpush1.msra.mxu0 %v218
    %314 = vmatprep.subr.mxu0 0.0
    %315 = vmatpush2.msra.mxu0 0.0
    %316 = vmatprep.subr.mxu0 0.0
    %317 = vmatpush2.msra.mxu0 0.0
    %318 = vmatprep.subr.mxu0 0.0
    %319 = vmatpush2.msra.mxu0 0.0
    %320 = vmatprep.subr.mxu0 0.0
    %321 = vmatpush2.msra.mxu0 0.0
    %322 = vmatprep.subr.mxu0 0.0
    %323 = vmatpush2.msra.mxu0 0.0
    %324 = vmatprep.subr.mxu0 0.0
    %325 = vmatpush2.msra.mxu0 0.0
    %326 = vmatprep.subr.mxu0 0.0
    %327 = vmatpush2.msra.mxu0 0.0
    %328 = vmatprep.subr.mxu0 0.0
    %329 = vmatpush2.msra.mxu0 0.0
    %330 = vmatprep.subr.mxu0 0.0
    %331 = vmatpush2.msra.mxu0 0.0
    %332 = vmatprep.subr.mxu0 0.0
    %333 = vmatpush2.msra.mxu0 0.0
    %334 = vmatprep.subr.mxu0 0.0
    %335 = vmatpush2.msra.mxu0 0.0
    %336 = vmatprep.subr.mxu0 0.0
    %337 = vmatpush2.msra.mxu0 0.0
    %338 = vmatprep.subr.mxu0 0.0
    %339 = vmatpush2.msra.mxu0 0.0
    %340 = vmatprep.subr.mxu0 0.0
    %341 = vmatpush2.msra.mxu0 0.0
    %342 = vmatprep.subr.mxu0 0.0
    %343 = vmatpush2.msra.mxu0 0.0
    %344 = vmatprep.subr.mxu0 0.0
    %345 = vmatpush2.msra.mxu0 0.0
    %346 = vmatprep.mubr.f32.mxu0 0.0
    %347 = vmatmul.mubr.f32.gmra.mxu0 %v265
    %v348 = vpop.f32.mrf.mxu0
    %v349 = vadd.f32 %v261, %v348
    %v350 = vpop.f32.mrf.mxu0
    %351 = vmatprep.mubr.f32.mxu0 0.0
    %352 = vmatmul.mubr.f32.gmra.mxu0 %v268
    %v353 = vpop.f32.mrf.mxu0
    %v354 = vadd.f32 %v261, %v353
    %v355 = vpop.f32.mrf.mxu0
    %356 = vmatprep.mubr.f32.mxu0 0.0
    %357 = vmatmul.mubr.f32.gmra.mxu0 %v271
    %v358 = vpop.f32.mrf.mxu0
    %v359 = vadd.f32 %v261, %v358
    %v360 = vpop.f32.mrf.mxu0
    %361 = vmatprep.mubr.f32.mxu0 0.0
    %362 = vmatmul.mubr.f32.gmra.mxu0 %v274
    %v363 = vpop.f32.mrf.mxu0
    %v364 = vadd.f32 %v261, %v363
    %v365 = vpop.f32.mrf.mxu0
    %366 = vmatprep.mubr.f32.mxu0 0.0
    %367 = vmatmul.mubr.f32.gmra.mxu0 %v277
    %v368 = vpop.f32.mrf.mxu0
    %v369 = vadd.f32 %v261, %v368
    %v370 = vpop.f32.mrf.mxu0
    %371 = vmatprep.mubr.f32.mxu0 0.0
    %372 = vmatmul.mubr.f32.gmra.mxu0 %v280
    %v373 = vpop.f32.mrf.mxu0
    %v374 = vadd.f32 %v261, %v373
    %v375 = vpop.f32.mrf.mxu0
    %376 = vdwg.mxu0
    %vm377 = vcmp.gt.f32.partialorder %v349, 0.0
    %vm378 = vcmp.gt.f32.partialorder %v354, 0.0
    %vm379 = vcmp.gt.f32.partialorder %v359, 0.0
    %vm380 = vcmp.gt.f32.partialorder %v364, 0.0
    %vm381 = vcmp.gt.f32.partialorder %v369, 0.0
    %vm382 = vcmp.gt.f32.partialorder %v374, 0.0
    %v383 = vmul.f32 %v349, 0.2
    %v384 = vmul.f32 %v354, 0.2
    %v385 = vmul.f32 %v359, 0.2
    %v386 = vmul.f32 %v364, 0.2
    %v387 = vmul.f32 %v369, 0.2
    %v388 = vmul.f32 %v374, 0.2
    %v389 = vsel %vm377, %v349, %v383
    %v390 = vsel %vm378, %v354, %v384
    %v391 = vsel %vm379, %v359, %v385
    %v392 = vsel %vm380, %v364, %v386
    %v393 = vsel %vm381, %v369, %v387
    %v394 = vsel %vm382, %v374, %v388
    %v395 = vld [vmem:[%s1] sm:$0xff]
    %v396 = vld [vmem:[%s1 + $0x8] sm:$0xff]
    %v397 = vld [vmem:[%s1 + $0x10] sm:$0xff]
    %v398 = vld [vmem:[%s1 + $0x18] sm:$0xff]
    %v399 = vld [vmem:[%s1 + $0x20] sm:$0xff]
    %v400 = vld [vmem:[%s1 + $0x28] sm:$0xff]
    %v401 = vld [vmem:[#allocation7] sm:$0xff]
    %v402 = vld [vmem:[#allocation7 + $0x8] sm:$0xff]
    %v403 = vld [vmem:[#allocation7 + $0x10] sm:$0xff]
    %v404 = vld [vmem:[#allocation7 + $0x18] sm:$0xff]
    %v405 = vld [vmem:[#allocation7 + $0x20] sm:$0xff]
    %v406 = vld [vmem:[#allocation7 + $0x28] sm:$0xff]
    %v407 = vld [vmem:[#allocation7 + $0x30] sm:$0xff]
    %v408 = vld [vmem:[#allocation7 + $0x38] sm:$0xff]
    %v409 = vld [vmem:[#allocation7 + $0x40] sm:$0xff]
    %v410 = vld [vmem:[#allocation7 + $0x48] sm:$0xff]
    %v411 = vld [vmem:[#allocation7 + $0x50] sm:$0xff]
    %v412 = vld [vmem:[#allocation7 + $0x58] sm:$0xff]
    %v413 = vld [vmem:[#allocation7 + $0x60] sm:$0xff]
    %v414 = vld [vmem:[#allocation7 + $0x68] sm:$0xff]
    %v415 = vld [vmem:[#allocation7 + $0x70] sm:$0xff]
    %v416 = vld [vmem:[#allocation7 + $0x78] sm:$0xff]
    %417 = vmatprep.subr.mxu0 0.0
    %418 = vmatpush1.msra.mxu0 %v416
    %419 = vmatprep.subr.mxu0 0.0
    %420 = vmatpush1.msra.mxu0 %v415
    %421 = vmatprep.subr.mxu0 0.0
    %422 = vmatpush1.msra.mxu0 %v414
    %423 = vmatprep.subr.mxu0 0.0
    %424 = vmatpush1.msra.mxu0 %v413
    %425 = vmatprep.subr.mxu0 0.0
    %426 = vmatpush1.msra.mxu0 %v412
    %427 = vmatprep.subr.mxu0 0.0
    %428 = vmatpush1.msra.mxu0 %v411
    %429 = vmatprep.subr.mxu0 0.0
    %430 = vmatpush1.msra.mxu0 %v410
    %431 = vmatprep.subr.mxu0 0.0
    %432 = vmatpush1.msra.mxu0 %v409
    %433 = vmatprep.subr.mxu0 0.0
    %434 = vmatpush1.msra.mxu0 %v408
    %435 = vmatprep.subr.mxu0 0.0
    %436 = vmatpush1.msra.mxu0 %v407
    %437 = vmatprep.subr.mxu0 0.0
    %438 = vmatpush1.msra.mxu0 %v406
    %439 = vmatprep.subr.mxu0 0.0
    %440 = vmatpush1.msra.mxu0 %v405
    %441 = vmatprep.subr.mxu0 0.0
    %442 = vmatpush1.msra.mxu0 %v404
    %443 = vmatprep.subr.mxu0 0.0
    %444 = vmatpush1.msra.mxu0 %v403
    %445 = vmatprep.subr.mxu0 0.0
    %446 = vmatpush1.msra.mxu0 %v402
    %447 = vmatprep.subr.mxu0 0.0
    %448 = vmatpush1.msra.mxu0 %v401
    %449 = vmatprep.subr.mxu0 0.0
    %450 = vmatpush2.msra.mxu0 0.0
    %451 = vmatprep.subr.mxu0 0.0
    %452 = vmatpush2.msra.mxu0 0.0
    %453 = vmatprep.subr.mxu0 0.0
    %454 = vmatpush2.msra.mxu0 0.0
    %455 = vmatprep.subr.mxu0 0.0
    %456 = vmatpush2.msra.mxu0 0.0
    %457 = vmatprep.subr.mxu0 0.0
    %458 = vmatpush2.msra.mxu0 0.0
    %459 = vmatprep.subr.mxu0 0.0
    %460 = vmatpush2.msra.mxu0 0.0
    %461 = vmatprep.subr.mxu0 0.0
    %462 = vmatpush2.msra.mxu0 0.0
    %463 = vmatprep.subr.mxu0 0.0
    %464 = vmatpush2.msra.mxu0 0.0
    %465 = vmatprep.subr.mxu0 0.0
    %466 = vmatpush2.msra.mxu0 0.0
    %467 = vmatprep.subr.mxu0 0.0
    %468 = vmatpush2.msra.mxu0 0.0
    %469 = vmatprep.subr.mxu0 0.0
    %470 = vmatpush2.msra.mxu0 0.0
    %471 = vmatprep.subr.mxu0 0.0
    %472 = vmatpush2.msra.mxu0 0.0
    %473 = vmatprep.subr.mxu0 0.0
    %474 = vmatpush2.msra.mxu0 0.0
    %475 = vmatprep.subr.mxu0 0.0
    %476 = vmatpush2.msra.mxu0 0.0
    %477 = vmatprep.subr.mxu0 0.0
    %478 = vmatpush2.msra.mxu0 0.0
    %479 = vmatprep.subr.mxu0 0.0
    %480 = vmatpush2.msra.mxu0 0.0
    %481 = vmatprep.mubr.f32.mxu0 0.0
    %482 = vmatmul.mubr.f32.gmra.mxu0 %v395
    %v483 = vpop.f32.mrf.mxu0
    %v484 = vadd.f32 0.0, %v483
    %v485 = vpop.f32.mrf.mxu0
    %486 = vmatprep.mubr.f32.mxu0 0.0
    %487 = vmatmul.mubr.f32.gmra.mxu0 %v396
    %v488 = vpop.f32.mrf.mxu0
    %v489 = vadd.f32 0.0, %v488
    %v490 = vpop.f32.mrf.mxu0
    %491 = vmatprep.mubr.f32.mxu0 0.0
    %492 = vmatmul.mubr.f32.gmra.mxu0 %v397
    %v493 = vpop.f32.mrf.mxu0
    %v494 = vadd.f32 0.0, %v493
    %v495 = vpop.f32.mrf.mxu0
    %496 = vmatprep.mubr.f32.mxu0 0.0
    %497 = vmatmul.mubr.f32.gmra.mxu0 %v398
    %v498 = vpop.f32.mrf.mxu0
    %v499 = vadd.f32 0.0, %v498
    %v500 = vpop.f32.mrf.mxu0
    %501 = vmatprep.mubr.f32.mxu0 0.0
    %502 = vmatmul.mubr.f32.gmra.mxu0 %v399
    %v503 = vpop.f32.mrf.mxu0
    %v504 = vadd.f32 0.0, %v503
    %v505 = vpop.f32.mrf.mxu0
    %506 = vmatprep.mubr.f32.mxu0 0.0
    %507 = vmatmul.mubr.f32.gmra.mxu0 %v400
    %v508 = vpop.f32.mrf.mxu0
    %v509 = vadd.f32 0.0, %v508
    %v510 = vpop.f32.mrf.mxu0
    %511 = vdwg.mxu0
    %v512 = vld [vmem:[%s9] sm:$0x1]
    %v514 = vlaneseq
    %v515 = vshrl.u32 %v514, 7
    %v516 = vsub.s32 0, %v515
    %v517 = vrot.slane %v512, %v516
    %vm519 = vcmask 392192
    %v521 = vsel %vm519, %v113, 0
    %v524 = vsel %vm519, %v114, 0
    %v527 = vsel %vm519, %v115, 0
    %v530 = vsel %vm519, %v116, 0
    %v533 = vsel %vm519, %v117, 0
    %v536 = vsel %vm519, %v118, 0
    %v539 = vsel %vm519, %v119, 0
    %v542 = vsel %vm519, %v120, 0
    %544 = vmatprep.subr.mxu0 0.0
    %545 = vmatpush1.msra.mxu0 0.0
    %546 = vmatprep.subr.mxu0 0.0
    %547 = vmatpush1.msra.mxu0 0.0
    %548 = vmatprep.subr.mxu0 0.0
    %549 = vmatpush1.msra.mxu0 0.0
    %550 = vmatprep.subr.mxu0 0.0
    %551 = vmatpush1.msra.mxu0 0.0
    %552 = vmatprep.subr.mxu0 0.0
    %553 = vmatpush1.msra.mxu0 0.0
    %554 = vmatprep.subr.mxu0 0.0
    %555 = vmatpush1.msra.mxu0 0.0
    %556 = vmatprep.subr.mxu0 0.0
    %557 = vmatpush1.msra.mxu0 0.0
    %558 = vmatprep.subr.mxu0 0.0
    %559 = vmatpush1.msra.mxu0 0.0
    %560 = vmatprep.subr.mxu0 0.0
    %561 = vmatpush1.msra.mxu0 0.0
    %562 = vmatprep.subr.mxu0 0.0
    %563 = vmatpush1.msra.mxu0 0.0
    %564 = vmatprep.subr.mxu0 0.0
    %565 = vmatpush1.msra.mxu0 %v509
    %566 = vmatprep.subr.mxu0 0.0
    %567 = vmatpush1.msra.mxu0 %v504
    %568 = vmatprep.subr.mxu0 0.0
    %569 = vmatpush1.msra.mxu0 %v499
    %570 = vmatprep.subr.mxu0 0.0
    %571 = vmatpush1.msra.mxu0 %v494
    %572 = vmatprep.subr.mxu0 0.0
    %573 = vmatpush1.msra.mxu0 %v489
    %574 = vmatprep.subr.mxu0 0.0
    %575 = vmatpush1.msra.mxu0 %v484
    %576 = vmatprep.subr.mxu0 0.0
    %577 = vmatpush2.msra.mxu0 0.0
    %578 = vmatprep.subr.mxu0 0.0
    %579 = vmatpush2.msra.mxu0 0.0
    %580 = vmatprep.subr.mxu0 0.0
    %581 = vmatpush2.msra.mxu0 0.0
    %582 = vmatprep.subr.mxu0 0.0
    %583 = vmatpush2.msra.mxu0 0.0
    %584 = vmatprep.subr.mxu0 0.0
    %585 = vmatpush2.msra.mxu0 0.0
    %586 = vmatprep.subr.mxu0 0.0
    %587 = vmatpush2.msra.mxu0 0.0
    %588 = vmatprep.subr.mxu0 0.0
    %589 = vmatpush2.msra.mxu0 0.0
    %590 = vmatprep.subr.mxu0 0.0
    %591 = vmatpush2.msra.mxu0 0.0
    %592 = vmatprep.subr.mxu0 0.0
    %593 = vmatpush2.msra.mxu0 0.0
    %594 = vmatprep.subr.mxu0 0.0
    %595 = vmatpush2.msra.mxu0 0.0
    %596 = vmatprep.subr.mxu0 0.0
    %597 = vmatpush2.msra.mxu0 0.0
    %598 = vmatprep.subr.mxu0 0.0
    %599 = vmatpush2.msra.mxu0 0.0
    %600 = vmatprep.subr.mxu0 0.0
    %601 = vmatpush2.msra.mxu0 0.0
    %602 = vmatprep.subr.mxu0 0.0
    %603 = vmatpush2.msra.mxu0 0.0
    %604 = vmatprep.subr.mxu0 0.0
    %605 = vmatpush2.msra.mxu0 0.0
    %606 = vmatprep.subr.mxu0 0.0
    %607 = vmatpush2.msra.mxu0 0.0
    %608 = vmatprep.mubr.f32.mxu0 0.0
    %609 = vmatmul.mubr.f32.gmra.mxu0 %v521
    %v610 = vpop.f32.mrf.mxu0
    %v611 = vadd.f32 %v517, %v610
    %v612 = vpop.f32.mrf.mxu0
    %613 = vmatprep.mubr.f32.mxu0 0.0
    %614 = vmatmul.mubr.f32.gmra.mxu0 %v524
    %v615 = vpop.f32.mrf.mxu0
    %v616 = vadd.f32 %v517, %v615
    %v617 = vpop.f32.mrf.mxu0
    %618 = vmatprep.mubr.f32.mxu0 0.0
    %619 = vmatmul.mubr.f32.gmra.mxu0 %v527
    %v620 = vpop.f32.mrf.mxu0
    %v621 = vadd.f32 %v517, %v620
    %v622 = vpop.f32.mrf.mxu0
    %623 = vmatprep.mubr.f32.mxu0 0.0
    %624 = vmatmul.mubr.f32.gmra.mxu0 %v530
    %v625 = vpop.f32.mrf.mxu0
    %v626 = vadd.f32 %v517, %v625
    %v627 = vpop.f32.mrf.mxu0
    %628 = vmatprep.mubr.f32.mxu0 0.0
    %629 = vmatmul.mubr.f32.gmra.mxu0 %v533
    %v630 = vpop.f32.mrf.mxu0
    %v631 = vadd.f32 %v517, %v630
    %v632 = vpop.f32.mrf.mxu0
    %633 = vmatprep.mubr.f32.mxu0 0.0
    %634 = vmatmul.mubr.f32.gmra.mxu0 %v536
    %v635 = vpop.f32.mrf.mxu0
    %v636 = vadd.f32 %v517, %v635
    %v637 = vpop.f32.mrf.mxu0
    %638 = vmatprep.mubr.f32.mxu0 0.0
    %639 = vmatmul.mubr.f32.gmra.mxu0 %v539
    %v640 = vpop.f32.mrf.mxu0
    %v641 = vadd.f32 %v517, %v640
    %v642 = vpop.f32.mrf.mxu0
    %643 = vmatprep.mubr.f32.mxu0 0.0
    %644 = vmatmul.mubr.f32.gmra.mxu0 %v542
    %v645 = vpop.f32.mrf.mxu0
    %v646 = vadd.f32 %v517, %v645
    %v647 = vpop.f32.mrf.mxu0
    %648 = vdwg.mxu0
    %vm649 = vcmp.gt.f32.partialorder %v611, 0.0
    %vm650 = vcmp.gt.f32.partialorder %v616, 0.0
    %vm651 = vcmp.gt.f32.partialorder %v621, 0.0
    %vm652 = vcmp.gt.f32.partialorder %v626, 0.0
    %vm653 = vcmp.gt.f32.partialorder %v631, 0.0
    %vm654 = vcmp.gt.f32.partialorder %v636, 0.0
    %vm655 = vcmp.gt.f32.partialorder %v641, 0.0
    %vm656 = vcmp.gt.f32.partialorder %v646, 0.0
    %v657 = vmul.f32 %v611, 0.2
    %v658 = vmul.f32 %v616, 0.2
    %v659 = vmul.f32 %v621, 0.2
    %v660 = vmul.f32 %v626, 0.2
    %v661 = vmul.f32 %v631, 0.2
    %v662 = vmul.f32 %v636, 0.2
    %v663 = vmul.f32 %v641, 0.2
    %v664 = vmul.f32 %v646, 0.2
    %v665 = vsel %vm649, %v611, %v657
    %v666 = vsel %vm650, %v616, %v658
    %v667 = vsel %vm651, %v621, %v659
    %v668 = vsel %vm652, %v626, %v660
    %v669 = vsel %vm653, %v631, %v661
    %v670 = vsel %vm654, %v636, %v662
    %v671 = vsel %vm655, %v641, %v663
    %v672 = vsel %vm656, %v646, %v664
    %v673 = vld [vmem:[#allocation8] sm:$0xff]
    %v674 = vld [vmem:[#allocation8 + $0x8] sm:$0xff]
    %v675 = vld [vmem:[#allocation8 + $0x10] sm:$0xff]
    %v676 = vld [vmem:[#allocation8 + $0x18] sm:$0xff]
    %v677 = vld [vmem:[#allocation8 + $0x20] sm:$0xff]
    %v678 = vld [vmem:[#allocation8 + $0x28] sm:$0xff]
    %v679 = vld [vmem:[#allocation8 + $0x30] sm:$0xff]
    %v680 = vld [vmem:[#allocation8 + $0x38] sm:$0xff]
    %v681 = vld [vmem:[#allocation8 + $0x40] sm:$0xff]
    %v682 = vld [vmem:[#allocation8 + $0x48] sm:$0xff]
    %v683 = vld [vmem:[#allocation8 + $0x50] sm:$0xff]
    %v684 = vld [vmem:[#allocation8 + $0x58] sm:$0xff]
    %v685 = vld [vmem:[#allocation8 + $0x60] sm:$0xff]
    %v686 = vld [vmem:[#allocation8 + $0x68] sm:$0xff]
    %v687 = vld [vmem:[#allocation8 + $0x70] sm:$0xff]
    %v688 = vld [vmem:[#allocation8 + $0x78] sm:$0xff]
    %689 = vmatprep.subr.mxu0 0.0
    %690 = vmatpush1.msra.mxu0 %v688
    %691 = vmatprep.subr.mxu0 0.0
    %692 = vmatpush1.msra.mxu0 %v687
    %693 = vmatprep.subr.mxu0 0.0
    %694 = vmatpush1.msra.mxu0 %v686
    %695 = vmatprep.subr.mxu0 0.0
    %696 = vmatpush1.msra.mxu0 %v685
    %697 = vmatprep.subr.mxu0 0.0
    %698 = vmatpush1.msra.mxu0 %v684
    %699 = vmatprep.subr.mxu0 0.0
    %700 = vmatpush1.msra.mxu0 %v683
    %701 = vmatprep.subr.mxu0 0.0
    %702 = vmatpush1.msra.mxu0 %v682
    %703 = vmatprep.subr.mxu0 0.0
    %704 = vmatpush1.msra.mxu0 %v681
    %705 = vmatprep.subr.mxu0 0.0
    %706 = vmatpush1.msra.mxu0 %v680
    %707 = vmatprep.subr.mxu0 0.0
    %708 = vmatpush1.msra.mxu0 %v679
    %709 = vmatprep.subr.mxu0 0.0
    %710 = vmatpush1.msra.mxu0 %v678
    %711 = vmatprep.subr.mxu0 0.0
    %712 = vmatpush1.msra.mxu0 %v677
    %713 = vmatprep.subr.mxu0 0.0
    %714 = vmatpush1.msra.mxu0 %v676
    %715 = vmatprep.subr.mxu0 0.0
    %716 = vmatpush1.msra.mxu0 %v675
    %717 = vmatprep.subr.mxu0 0.0
    %718 = vmatpush1.msra.mxu0 %v674
    %719 = vmatprep.subr.mxu0 0.0
    %720 = vmatpush1.msra.mxu0 %v673
    %721 = vmatprep.subr.mxu0 0.0
    %722 = vmatpush2.msra.mxu0 0.0
    %723 = vmatprep.subr.mxu0 0.0
    %724 = vmatpush2.msra.mxu0 0.0
    %725 = vmatprep.subr.mxu0 0.0
    %726 = vmatpush2.msra.mxu0 0.0
    %727 = vmatprep.subr.mxu0 0.0
    %728 = vmatpush2.msra.mxu0 0.0
    %729 = vmatprep.subr.mxu0 0.0
    %730 = vmatpush2.msra.mxu0 0.0
    %731 = vmatprep.subr.mxu0 0.0
    %732 = vmatpush2.msra.mxu0 0.0
    %733 = vmatprep.subr.mxu0 0.0
    %734 = vmatpush2.msra.mxu0 0.0
    %735 = vmatprep.subr.mxu0 0.0
    %736 = vmatpush2.msra.mxu0 0.0
    %737 = vmatprep.subr.mxu0 0.0
    %738 = vmatpush2.msra.mxu0 0.0
    %739 = vmatprep.subr.mxu0 0.0
    %740 = vmatpush2.msra.mxu0 0.0
    %741 = vmatprep.subr.mxu0 0.0
    %742 = vmatpush2.msra.mxu0 0.0
    %743 = vmatprep.subr.mxu0 0.0
    %744 = vmatpush2.msra.mxu0 0.0
    %745 = vmatprep.subr.mxu0 0.0
    %746 = vmatpush2.msra.mxu0 0.0
    %747 = vmatprep.subr.mxu0 0.0
    %748 = vmatpush2.msra.mxu0 0.0
    %749 = vmatprep.subr.mxu0 0.0
    %750 = vmatpush2.msra.mxu0 0.0
    %751 = vmatprep.subr.mxu0 0.0
    %752 = vmatpush2.msra.mxu0 0.0
    %753 = vmatprep.mubr.f32.mxu0 0.0
    %754 = vmatmul.mubr.f32.gmra.mxu0 %v389
    %v755 = vpop.f32.mrf.mxu0
    %v756 = vadd.f32 0.0, %v755
    %v757 = vpop.f32.mrf.mxu0
    %758 = vmatprep.mubr.f32.mxu0 0.0
    %759 = vmatmul.mubr.f32.gmra.mxu0 %v390
    %v760 = vpop.f32.mrf.mxu0
    %v761 = vadd.f32 0.0, %v760
    %v762 = vpop.f32.mrf.mxu0
    %763 = vmatprep.mubr.f32.mxu0 0.0
    %764 = vmatmul.mubr.f32.gmra.mxu0 %v391
    %v765 = vpop.f32.mrf.mxu0
    %v766 = vadd.f32 0.0, %v765
    %v767 = vpop.f32.mrf.mxu0
    %768 = vmatprep.mubr.f32.mxu0 0.0
    %769 = vmatmul.mubr.f32.gmra.mxu0 %v392
    %v770 = vpop.f32.mrf.mxu0
    %v771 = vadd.f32 0.0, %v770
    %v772 = vpop.f32.mrf.mxu0
    %773 = vmatprep.mubr.f32.mxu0 0.0
    %774 = vmatmul.mubr.f32.gmra.mxu0 %v393
    %v775 = vpop.f32.mrf.mxu0
    %v776 = vadd.f32 0.0, %v775
    %v777 = vpop.f32.mrf.mxu0
    %778 = vmatprep.mubr.f32.mxu0 0.0
    %779 = vmatmul.mubr.f32.gmra.mxu0 %v394
    %v780 = vpop.f32.mrf.mxu0
    %v781 = vadd.f32 0.0, %v780
    %v782 = vpop.f32.mrf.mxu0
    %783 = vdwg.mxu0
    %v784 = vld [vmem:[%s10] sm:$0x1]
    %v786 = vlaneseq
    %v787 = vshrl.u32 %v786, 7
    %v788 = vsub.s32 0, %v787
    %v789 = vrot.slane %v784, %v788
    %791 = vmatprep.subr.mxu0 0.0
    %792 = vmatpush1.msra.mxu0 0.0
    %793 = vmatprep.subr.mxu0 0.0
    %794 = vmatpush1.msra.mxu0 0.0
    %795 = vmatprep.subr.mxu0 0.0
    %796 = vmatpush1.msra.mxu0 0.0
    %797 = vmatprep.subr.mxu0 0.0
    %798 = vmatpush1.msra.mxu0 0.0
    %799 = vmatprep.subr.mxu0 0.0
    %800 = vmatpush1.msra.mxu0 0.0
    %801 = vmatprep.subr.mxu0 0.0
    %802 = vmatpush1.msra.mxu0 0.0
    %803 = vmatprep.subr.mxu0 0.0
    %804 = vmatpush1.msra.mxu0 0.0
    %805 = vmatprep.subr.mxu0 0.0
    %806 = vmatpush1.msra.mxu0 0.0
    %807 = vmatprep.subr.mxu0 0.0
    %808 = vmatpush1.msra.mxu0 0.0
    %809 = vmatprep.subr.mxu0 0.0
    %810 = vmatpush1.msra.mxu0 0.0
    %811 = vmatprep.subr.mxu0 0.0
    %812 = vmatpush1.msra.mxu0 %v781
    %813 = vmatprep.subr.mxu0 0.0
    %814 = vmatpush1.msra.mxu0 %v776
    %815 = vmatprep.subr.mxu0 0.0
    %816 = vmatpush1.msra.mxu0 %v771
    %817 = vmatprep.subr.mxu0 0.0
    %818 = vmatpush1.msra.mxu0 %v766
    %819 = vmatprep.subr.mxu0 0.0
    %820 = vmatpush1.msra.mxu0 %v761
    %821 = vmatprep.subr.mxu0 0.0
    %822 = vmatpush1.msra.mxu0 %v756
    %823 = vmatprep.subr.mxu0 0.0
    %824 = vmatpush2.msra.mxu0 0.0
    %825 = vmatprep.subr.mxu0 0.0
    %826 = vmatpush2.msra.mxu0 0.0
    %827 = vmatprep.subr.mxu0 0.0
    %828 = vmatpush2.msra.mxu0 0.0
    %829 = vmatprep.subr.mxu0 0.0
    %830 = vmatpush2.msra.mxu0 0.0
    %831 = vmatprep.subr.mxu0 0.0
    %832 = vmatpush2.msra.mxu0 0.0
    %833 = vmatprep.subr.mxu0 0.0
    %834 = vmatpush2.msra.mxu0 0.0
    %835 = vmatprep.subr.mxu0 0.0
    %836 = vmatpush2.msra.mxu0 0.0
    %837 = vmatprep.subr.mxu0 0.0
    %838 = vmatpush2.msra.mxu0 0.0
    %839 = vmatprep.subr.mxu0 0.0
    %840 = vmatpush2.msra.mxu0 0.0
    %841 = vmatprep.subr.mxu0 0.0
    %842 = vmatpush2.msra.mxu0 0.0
    %843 = vmatprep.subr.mxu0 0.0
    %844 = vmatpush2.msra.mxu0 0.0
    %845 = vmatprep.subr.mxu0 0.0
    %846 = vmatpush2.msra.mxu0 0.0
    %847 = vmatprep.subr.mxu0 0.0
    %848 = vmatpush2.msra.mxu0 0.0
    %849 = vmatprep.subr.mxu0 0.0
    %850 = vmatpush2.msra.mxu0 0.0
    %851 = vmatprep.subr.mxu0 0.0
    %852 = vmatpush2.msra.mxu0 0.0
    %853 = vmatprep.subr.mxu0 0.0
    %854 = vmatpush2.msra.mxu0 0.0
    %855 = vmatprep.mubr.f32.mxu0 0.0
    %856 = vmatmul.mubr.f32.gmra.mxu0 %v521
    %v857 = vpop.f32.mrf.mxu0
    %v858 = vadd.f32 %v789, %v857
    %v859 = vpop.f32.mrf.mxu0
    %860 = vmatprep.mubr.f32.mxu0 0.0
    %861 = vmatmul.mubr.f32.gmra.mxu0 %v524
    %v862 = vpop.f32.mrf.mxu0
    %v863 = vadd.f32 %v789, %v862
    %v864 = vpop.f32.mrf.mxu0
    %865 = vmatprep.mubr.f32.mxu0 0.0
    %866 = vmatmul.mubr.f32.gmra.mxu0 %v527
    %v867 = vpop.f32.mrf.mxu0
    %v868 = vadd.f32 %v789, %v867
    %v869 = vpop.f32.mrf.mxu0
    %870 = vmatprep.mubr.f32.mxu0 0.0
    %871 = vmatmul.mubr.f32.gmra.mxu0 %v530
    %v872 = vpop.f32.mrf.mxu0
    %v873 = vadd.f32 %v789, %v872
    %v874 = vpop.f32.mrf.mxu0
    %875 = vmatprep.mubr.f32.mxu0 0.0
    %876 = vmatmul.mubr.f32.gmra.mxu0 %v533
    %v877 = vpop.f32.mrf.mxu0
    %v878 = vadd.f32 %v789, %v877
    %v879 = vpop.f32.mrf.mxu0
    %880 = vmatprep.mubr.f32.mxu0 0.0
    %881 = vmatmul.mubr.f32.gmra.mxu0 %v536
    %v882 = vpop.f32.mrf.mxu0
    %v883 = vadd.f32 %v789, %v882
    %v884 = vpop.f32.mrf.mxu0
    %885 = vmatprep.mubr.f32.mxu0 0.0
    %886 = vmatmul.mubr.f32.gmra.mxu0 %v539
    %v887 = vpop.f32.mrf.mxu0
    %v888 = vadd.f32 %v789, %v887
    %v889 = vpop.f32.mrf.mxu0
    %890 = vmatprep.mubr.f32.mxu0 0.0
    %891 = vmatmul.mubr.f32.gmra.mxu0 %v542
    %v892 = vpop.f32.mrf.mxu0
    %v893 = vadd.f32 %v789, %v892
    %v894 = vpop.f32.mrf.mxu0
    %895 = vdwg.mxu0
    %v896 = vmax.f32 %v858, 0.0
    %v897 = vmax.f32 %v863, 0.0
    %v898 = vmax.f32 %v868, 0.0
    %v899 = vmax.f32 %v873, 0.0
    %v900 = vmax.f32 %v878, 0.0
    %v901 = vmax.f32 %v883, 0.0
    %v902 = vmax.f32 %v888, 0.0
    %v903 = vmax.f32 %v893, 0.0
    %904 = vst [vmem:[#allocation11] sm:$0xff] %v896
    %905 = vst [vmem:[#allocation11 + $0x8] sm:$0xff] %v897
    %906 = vst [vmem:[#allocation11 + $0x10] sm:$0xff] %v898
    %907 = vst [vmem:[#allocation11 + $0x18] sm:$0xff] %v899
    %908 = vst [vmem:[#allocation11 + $0x20] sm:$0xff] %v900
    %909 = vst [vmem:[#allocation11 + $0x28] sm:$0xff] %v901
    %910 = vst [vmem:[#allocation11 + $0x30] sm:$0xff] %v902
    %911 = vst [vmem:[#allocation11 + $0x38] sm:$0xff] %v903
    %v912 = vld [vmem:[#allocation10] sm:$0xff]
    %v913 = vld [vmem:[#allocation10 + $0x8] sm:$0xff]
    %v914 = vld [vmem:[#allocation10 + $0x10] sm:$0xff]
    %v915 = vld [vmem:[#allocation10 + $0x18] sm:$0xff]
    %v916 = vld [vmem:[#allocation10 + $0x20] sm:$0xff]
    %v917 = vld [vmem:[#allocation10 + $0x28] sm:$0xff]
    %v918 = vld [vmem:[#allocation10 + $0x30] sm:$0xff]
    %v919 = vld [vmem:[#allocation10 + $0x38] sm:$0xff]
    %v920 = vld [vmem:[#allocation10 + $0x40] sm:$0xff]
    %v921 = vld [vmem:[#allocation10 + $0x48] sm:$0xff]
    %v922 = vld [vmem:[#allocation10 + $0x50] sm:$0xff]
    %v923 = vld [vmem:[#allocation10 + $0x58] sm:$0xff]
    %v924 = vld [vmem:[#allocation10 + $0x60] sm:$0xff]
    %v925 = vld [vmem:[#allocation10 + $0x68] sm:$0xff]
    %v926 = vld [vmem:[#allocation10 + $0x70] sm:$0xff]
    %v927 = vld [vmem:[#allocation10 + $0x78] sm:$0xff]
    %928 = vmatprep.subr.mxu0 0.0
    %929 = vmatpush1.msra.mxu0 %v927
    %930 = vmatprep.subr.mxu0 0.0
    %931 = vmatpush1.msra.mxu0 %v926
    %932 = vmatprep.subr.mxu0 0.0
    %933 = vmatpush1.msra.mxu0 %v925
    %934 = vmatprep.subr.mxu0 0.0
    %935 = vmatpush1.msra.mxu0 %v924
    %936 = vmatprep.subr.mxu0 0.0
    %937 = vmatpush1.msra.mxu0 %v923
    %938 = vmatprep.subr.mxu0 0.0
    %939 = vmatpush1.msra.mxu0 %v922
    %940 = vmatprep.subr.mxu0 0.0
    %941 = vmatpush1.msra.mxu0 %v921
    %942 = vmatprep.subr.mxu0 0.0
    %943 = vmatpush1.msra.mxu0 %v920
    %944 = vmatprep.subr.mxu0 0.0
    %945 = vmatpush1.msra.mxu0 %v919
    %946 = vmatprep.subr.mxu0 0.0
    %947 = vmatpush1.msra.mxu0 %v918
    %948 = vmatprep.subr.mxu0 0.0
    %949 = vmatpush1.msra.mxu0 %v917
    %950 = vmatprep.subr.mxu0 0.0
    %951 = vmatpush1.msra.mxu0 %v916
    %952 = vmatprep.subr.mxu0 0.0
    %953 = vmatpush1.msra.mxu0 %v915
    %954 = vmatprep.subr.mxu0 0.0
    %955 = vmatpush1.msra.mxu0 %v914
    %956 = vmatprep.subr.mxu0 0.0
    %957 = vmatpush1.msra.mxu0 %v913
    %958 = vmatprep.subr.mxu0 0.0
    %959 = vmatpush1.msra.mxu0 %v912
    %960 = vmatprep.subr.mxu0 0.0
    %961 = vmatpush2.msra.mxu0 0.0
    %962 = vmatprep.subr.mxu0 0.0
    %963 = vmatpush2.msra.mxu0 0.0
    %964 = vmatprep.subr.mxu0 0.0
    %965 = vmatpush2.msra.mxu0 0.0
    %966 = vmatprep.subr.mxu0 0.0
    %967 = vmatpush2.msra.mxu0 0.0
    %968 = vmatprep.subr.mxu0 0.0
    %969 = vmatpush2.msra.mxu0 0.0
    %970 = vmatprep.subr.mxu0 0.0
    %971 = vmatpush2.msra.mxu0 0.0
    %972 = vmatprep.subr.mxu0 0.0
    %973 = vmatpush2.msra.mxu0 0.0
    %974 = vmatprep.subr.mxu0 0.0
    %975 = vmatpush2.msra.mxu0 0.0
    %976 = vmatprep.subr.mxu0 0.0
    %977 = vmatpush2.msra.mxu0 0.0
    %978 = vmatprep.subr.mxu0 0.0
    %979 = vmatpush2.msra.mxu0 0.0
    %980 = vmatprep.subr.mxu0 0.0
    %981 = vmatpush2.msra.mxu0 0.0
    %982 = vmatprep.subr.mxu0 0.0
    %983 = vmatpush2.msra.mxu0 0.0
    %984 = vmatprep.subr.mxu0 0.0
    %985 = vmatpush2.msra.mxu0 0.0
    %986 = vmatprep.subr.mxu0 0.0
    %987 = vmatpush2.msra.mxu0 0.0
    %988 = vmatprep.subr.mxu0 0.0
    %989 = vmatpush2.msra.mxu0 0.0
    %990 = vmatprep.subr.mxu0 0.0
    %991 = vmatpush2.msra.mxu0 0.0
    %992 = vmatprep.mubr.f32.mxu0 0.0
    %993 = vmatmul.mubr.f32.gmra.mxu0 %v665
    %v994 = vpop.f32.mrf.mxu0
    %v995 = vadd.f32 0.0, %v994
    %v996 = vpop.f32.mrf.mxu0
    %997 = vmatprep.mubr.f32.mxu0 0.0
    %998 = vmatmul.mubr.f32.gmra.mxu0 %v666
    %v999 = vpop.f32.mrf.mxu0
    %v1000 = vadd.f32 0.0, %v999
    %v1001 = vpop.f32.mrf.mxu0
    %1002 = vmatprep.mubr.f32.mxu0 0.0
    %1003 = vmatmul.mubr.f32.gmra.mxu0 %v667
    %v1004 = vpop.f32.mrf.mxu0
    %v1005 = vadd.f32 0.0, %v1004
    %v1006 = vpop.f32.mrf.mxu0
    %1007 = vmatprep.mubr.f32.mxu0 0.0
    %1008 = vmatmul.mubr.f32.gmra.mxu0 %v668
    %v1009 = vpop.f32.mrf.mxu0
    %v1010 = vadd.f32 0.0, %v1009
    %v1011 = vpop.f32.mrf.mxu0
    %1012 = vmatprep.mubr.f32.mxu0 0.0
    %1013 = vmatmul.mubr.f32.gmra.mxu0 %v669
    %v1014 = vpop.f32.mrf.mxu0
    %v1015 = vadd.f32 0.0, %v1014
    %v1016 = vpop.f32.mrf.mxu0
    %1017 = vmatprep.mubr.f32.mxu0 0.0
    %1018 = vmatmul.mubr.f32.gmra.mxu0 %v670
    %v1019 = vpop.f32.mrf.mxu0
    %v1020 = vadd.f32 0.0, %v1019
    %v1021 = vpop.f32.mrf.mxu0
    %1022 = vmatprep.mubr.f32.mxu0 0.0
    %1023 = vmatmul.mubr.f32.gmra.mxu0 %v671
    %v1024 = vpop.f32.mrf.mxu0
    %v1025 = vadd.f32 0.0, %v1024
    %v1026 = vpop.f32.mrf.mxu0
    %1027 = vmatprep.mubr.f32.mxu0 0.0
    %1028 = vmatmul.mubr.f32.gmra.mxu0 %v672
    %v1029 = vpop.f32.mrf.mxu0
    %v1030 = vadd.f32 0.0, %v1029
    %v1031 = vpop.f32.mrf.mxu0
    %1032 = vdwg.mxu0
    %v1033 = vld [vmem:[%s11] sm:$0x1]
    %v1035 = vlaneseq
    %v1036 = vshrl.u32 %v1035, 7
    %v1037 = vsub.s32 0, %v1036
    %v1038 = vrot.slane %v1033, %v1037
    %1040 = vmatprep.subr.mxu0 0.0
    %1041 = vmatpush1.msra.mxu0 0.0
    %1042 = vmatprep.subr.mxu0 0.0
    %1043 = vmatpush1.msra.mxu0 0.0
    %1044 = vmatprep.subr.mxu0 0.0
    %1045 = vmatpush1.msra.mxu0 0.0
    %1046 = vmatprep.subr.mxu0 0.0
    %1047 = vmatpush1.msra.mxu0 0.0
    %1048 = vmatprep.subr.mxu0 0.0
    %1049 = vmatpush1.msra.mxu0 0.0
    %1050 = vmatprep.subr.mxu0 0.0
    %1051 = vmatpush1.msra.mxu0 0.0
    %1052 = vmatprep.subr.mxu0 0.0
    %1053 = vmatpush1.msra.mxu0 0.0
    %1054 = vmatprep.subr.mxu0 0.0
    %1055 = vmatpush1.msra.mxu0 0.0
    %1056 = vmatprep.subr.mxu0 0.0
    %1057 = vmatpush1.msra.mxu0 %v1030
    %1058 = vmatprep.subr.mxu0 0.0
    %1059 = vmatpush1.msra.mxu0 %v1025
    %1060 = vmatprep.subr.mxu0 0.0
    %1061 = vmatpush1.msra.mxu0 %v1020
    %1062 = vmatprep.subr.mxu0 0.0
    %1063 = vmatpush1.msra.mxu0 %v1015
    %1064 = vmatprep.subr.mxu0 0.0
    %1065 = vmatpush1.msra.mxu0 %v1010
    %1066 = vmatprep.subr.mxu0 0.0
    %1067 = vmatpush1.msra.mxu0 %v1005
    %1068 = vmatprep.subr.mxu0 0.0
    %1069 = vmatpush1.msra.mxu0 %v1000
    %1070 = vmatprep.subr.mxu0 0.0
    %1071 = vmatpush1.msra.mxu0 %v995
    %1072 = vmatprep.subr.mxu0 0.0
    %1073 = vmatpush2.msra.mxu0 0.0
    %1074 = vmatprep.subr.mxu0 0.0
    %1075 = vmatpush2.msra.mxu0 0.0
    %1076 = vmatprep.subr.mxu0 0.0
    %1077 = vmatpush2.msra.mxu0 0.0
    %1078 = vmatprep.subr.mxu0 0.0
    %1079 = vmatpush2.msra.mxu0 0.0
    %1080 = vmatprep.subr.mxu0 0.0
    %1081 = vmatpush2.msra.mxu0 0.0
    %1082 = vmatprep.subr.mxu0 0.0
    %1083 = vmatpush2.msra.mxu0 0.0
    %1084 = vmatprep.subr.mxu0 0.0
    %1085 = vmatpush2.msra.mxu0 0.0
    %1086 = vmatprep.subr.mxu0 0.0
    %1087 = vmatpush2.msra.mxu0 0.0
    %1088 = vmatprep.subr.mxu0 0.0
    %1089 = vmatpush2.msra.mxu0 0.0
    %1090 = vmatprep.subr.mxu0 0.0
    %1091 = vmatpush2.msra.mxu0 0.0
    %1092 = vmatprep.subr.mxu0 0.0
    %1093 = vmatpush2.msra.mxu0 0.0
    %1094 = vmatprep.subr.mxu0 0.0
    %1095 = vmatpush2.msra.mxu0 0.0
    %1096 = vmatprep.subr.mxu0 0.0
    %1097 = vmatpush2.msra.mxu0 0.0
    %1098 = vmatprep.subr.mxu0 0.0
    %1099 = vmatpush2.msra.mxu0 0.0
    %1100 = vmatprep.subr.mxu0 0.0
    %1101 = vmatpush2.msra.mxu0 0.0
    %1102 = vmatprep.subr.mxu0 0.0
    %1103 = vmatpush2.msra.mxu0 0.0
    %1104 = vmatprep.mubr.f32.mxu0 0.0
    %1105 = vmatmul.mubr.f32.gmra.mxu0 %v265
    %v1106 = vpop.f32.mrf.mxu0
    %v1107 = vadd.f32 %v1038, %v1106
    %v1108 = vpop.f32.mrf.mxu0
    %1109 = vmatprep.mubr.f32.mxu0 0.0
    %1110 = vmatmul.mubr.f32.gmra.mxu0 %v268
    %v1111 = vpop.f32.mrf.mxu0
    %v1112 = vadd.f32 %v1038, %v1111
    %v1113 = vpop.f32.mrf.mxu0
    %1114 = vmatprep.mubr.f32.mxu0 0.0
    %1115 = vmatmul.mubr.f32.gmra.mxu0 %v271
    %v1116 = vpop.f32.mrf.mxu0
    %v1117 = vadd.f32 %v1038, %v1116
    %v1118 = vpop.f32.mrf.mxu0
    %1119 = vmatprep.mubr.f32.mxu0 0.0
    %1120 = vmatmul.mubr.f32.gmra.mxu0 %v274
    %v1121 = vpop.f32.mrf.mxu0
    %v1122 = vadd.f32 %v1038, %v1121
    %v1123 = vpop.f32.mrf.mxu0
    %1124 = vmatprep.mubr.f32.mxu0 0.0
    %1125 = vmatmul.mubr.f32.gmra.mxu0 %v277
    %v1126 = vpop.f32.mrf.mxu0
    %v1127 = vadd.f32 %v1038, %v1126
    %v1128 = vpop.f32.mrf.mxu0
    %1129 = vmatprep.mubr.f32.mxu0 0.0
    %1130 = vmatmul.mubr.f32.gmra.mxu0 %v280
    %v1131 = vpop.f32.mrf.mxu0
    %v1132 = vadd.f32 %v1038, %v1131
    %v1133 = vpop.f32.mrf.mxu0
    %1134 = vdwg.mxu0
    %v1135 = vmax.f32 %v1107, 0.0
    %v1136 = vmax.f32 %v1112, 0.0
    %v1137 = vmax.f32 %v1117, 0.0
    %v1138 = vmax.f32 %v1122, 0.0
    %v1139 = vmax.f32 %v1127, 0.0
    %v1140 = vmax.f32 %v1132, 0.0
    %1141 = vst [vmem:[#allocation12] sm:$0xff] %v1135
    %1142 = vst [vmem:[#allocation12 + $0x8] sm:$0xff] %v1136
    %1143 = vst [vmem:[#allocation12 + $0x10] sm:$0xff] %v1137
    %1144 = vst [vmem:[#allocation12 + $0x18] sm:$0xff] %v1138
    %1145 = vst [vmem:[#allocation12 + $0x20] sm:$0xff] %v1139
    %1146 = vst [vmem:[#allocation12 + $0x28] sm:$0xff] %v1140
    // Predicated region
    $region70: #{tpu_custom_call.1} parent=1 // pred_check
      _
    $region71: #{tpu_custom_call.1} parent=1 // pred_check_branch
      %1148 = sbr.rel (0) target = $region73
    $region72: #{tpu_custom_call.1} parent=1 // pred_region
      %s1150 = ssub.s32 1024, 1024
      %1151 = vsyncadd [#allocation4], %s1150
      %s1152 = sshll.u32 [#allocation11], 4
      %s1153 = int_to_ptr.vmem [resolvable:$true] %s1152
      %1158 = dma.vmem_to_hbm [thread:$0]  %s1153, 1024, %s12, [#allocation4], 128, 128, 8
    $region73: #{tpu_custom_call.1} parent=1 // pred_fallthru
      _
    // Predicated region
    $region74: #{tpu_custom_call.1} parent=1 // pred_check
      _
    $region75: #{tpu_custom_call.1} parent=1 // pred_check_branch
      %1160 = sbr.rel (0) target = $region77
    $region76: #{tpu_custom_call.1} parent=1 // pred_region
      %s1162 = ssub.s32 768, 768
      %1163 = vsyncadd [#allocation13], %s1162
      %s1164 = sshll.u32 [#allocation12], 4
      %s1165 = int_to_ptr.vmem [resolvable:$true] %s1164
      %1170 = dma.vmem_to_hbm [thread:$0]  %s1165, 768, %s13, [#allocation13], 128, 128, 8
    $region77: #{tpu_custom_call.1} parent=1 // pred_fallthru
      _
    // Predicated region
    $region78: #{tpu_custom_call.1} parent=1 // pred_check
      _
    $region79: #{tpu_custom_call.1} parent=1 // pred_check_branch
      %1172 = sbr.rel (0) target = $region81
    $region80: #{tpu_custom_call.1} parent=1 // pred_region
      %1173 = dma.done [#allocation4], 1024
    $region81: #{tpu_custom_call.1} parent=1 // pred_fallthru
      _
    // Predicated region
    $region82: #{tpu_custom_call.1} parent=1 // pred_check
      _
    $region83: #{tpu_custom_call.1} parent=1 // pred_check_branch
      %1175 = sbr.rel (0) target = $region85
    $region84: #{tpu_custom_call.1} parent=1 // pred_region
      %1176 = dma.done [#allocation13], 768
    $region85: #{tpu_custom_call.1} parent=1 // pred_fallthru
      _
    %1177 = vsyncpa [#allocation3], 1
    %1178 = vsyncpa [#allocation6], 1
    %1179 = vsyncpa [#allocation9], 1
    %1180 = vsyncpa [#allocation4], 1
    %1181 = vsyncpa [#allocation13], 1

</llo_original>
